<compile_context>
chip_gen: v7x
topology: tpu7x:2x2x1
jax: 0.10.0
libtpu: 0.0.40
codegen_flags: <defaults>
</compile_context>

<pallas_src>
import jax
import jax.numpy as jnp
from jax.experimental import pallas as pl
from jax.experimental.pallas import tpu as pltpu

HISTORY_DEPTH = 4
IN_DIM = 128 * HISTORY_DEPTH  # 512
HID = 256
OUT_DIM = 1
# Largest batch tile that fits the *default* scoped-VMEM limit on every
# generation (v5e: 16 MiB). At TB=1024 (f32 x): 2 x 2 MiB double-buffered x
# tile + ~0.8 MiB resident weights + ~5 MiB of h1/h2/bf16 temporaries ~ 10 MiB.
BATCH_TILE = 1024


def _round_up(x, m):
    return (x + m - 1) // m * m


def critic_kernel(x_ref, w1_ref, b1_ref, w2_ref, b2_ref, w3_ref, b3_ref, o_ref):
    # x_ref: (TB, 512) f32|bf16   w1: (512, 256) bf16   w2: (256, 256) bf16
    # b1,b2: (1, 256) f32         w3: (1, 256) f32      b3: (1,) f32 in SMEM
    # o_ref: (1, 1, TB) f32  — lane-dense output row (one value per lane)
    x = x_ref[...].astype(jnp.bfloat16)  # no-op if the x stream is already bf16

    # fc1 + relu (bf16 MXU inputs, f32 accumulation; bias/ReLU in f32)
    h1 = jnp.dot(x, w1_ref[...], preferred_element_type=jnp.float32)
    h1 = jnp.maximum(h1 + b1_ref[...], 0.0)

    # fc2 + relu
    h2 = jnp.dot(h1.astype(jnp.bfloat16), w2_ref[...],
                 preferred_element_type=jnp.float32)
    h2 = jnp.maximum(h2 + b2_ref[...], 0.0)

    # fc3 (value head, N=1): VPU multiply + XLU lane reduction instead of a
    # 256x1 MXU matmul; result written as one lane-dense (1, 1, TB) row
    # (one cheap sublane->lane relayout, then an unmasked wide store).
    v = jnp.sum(h2 * w3_ref[...], axis=-1) + b3_ref[0]        # (TB,)
    o_ref[...] = v[None, None, :].astype(o_ref.dtype)


def prepare_params(params):
    """One-time repack of f32 params into the kernel layout (bf16 weights)."""
    w1, b1, w2, b2, w3, b3 = params
    return (
        w1.astype(jnp.bfloat16),                   # (512, 256)
        b1.reshape(1, HID).astype(jnp.float32),    # (1, 256)
        w2.astype(jnp.bfloat16),                   # (256, 256)
        b2.reshape(1, HID).astype(jnp.float32),    # (1, 256)
        w3.reshape(1, HID).astype(jnp.float32),    # value-head row (1, 256)
        b3.reshape(1).astype(jnp.float32),         # SMEM scalar (1,)
    )


def critic_forward(mem, kernel_params, batch_tile=BATCH_TILE):
    """mem: (B, history_depth, 128) f32 or bf16 -> (B, 1) float32."""
    w1, b1, w2, b2, w3r, b3 = kernel_params
    B = mem.shape[0]
    x = mem.reshape(B, -1)                       # flatten(start_dim=1)
    if x.dtype not in (jnp.float32, jnp.bfloat16):
        x = x.astype(jnp.float32)

    # Sublane alignment: 8 for f32, 16 for bf16 (sublane packing).
    align = 16 if x.dtype == jnp.bfloat16 else 8
    # Keep >=2 tiles for mid-sized batches so the "parallel" grid axis can be
    # sharded across both v7x TensorCores; clamp to BATCH_TILE for large B.
    tb = min(batch_tile, max(align, _round_up((B + 1) // 2, align)))
    num_tiles = (B + tb - 1) // tb               # ragged edge block handled by Pallas

    flops = 2 * B * (IN_DIM * HID + HID * HID + HID)
    w_bytes = (IN_DIM * HID + HID * HID) * 2 + (3 * HID + 1) * 4
    bytes_accessed = B * IN_DIM * x.dtype.itemsize + B * 4 + w_bytes

    out = pl.pallas_call(
        critic_kernel,
        out_shape=jax.ShapeDtypeStruct((num_tiles, 1, tb), jnp.float32),
        grid=(num_tiles,),
        in_specs=[
            pl.BlockSpec((tb, IN_DIM), lambda i: (i, 0)),       # x: batch-tiled
            pl.BlockSpec((IN_DIM, HID), lambda i: (0, 0)),      # w1: resident
            pl.BlockSpec((1, HID), lambda i: (0, 0)),           # b1: resident
            pl.BlockSpec((HID, HID), lambda i: (0, 0)),         # w2: resident
            pl.BlockSpec((1, HID), lambda i: (0, 0)),           # b2: resident
            pl.BlockSpec((1, HID), lambda i: (0, 0)),           # w3 row: resident
            pl.BlockSpec(memory_space=pltpu.MemorySpace.SMEM),  # b3: SMEM scalar
        ],
        # Lane-dense output block: (1, 1, tb) == full array extent on the last
        # two dims -> unmasked wide stores, byte-dense output DMA.
        out_specs=pl.BlockSpec((1, 1, tb), lambda i: (i, 0, 0)),
        compiler_params=pltpu.CompilerParams(
            # Batch tiles are independent -> shard across TCs on v7x.
            dimension_semantics=("parallel",),
        ),
        cost_estimate=pl.CostEstimate(
            flops=flops, transcendentals=0, bytes_accessed=bytes_accessed),
    )(x, w1, b1, w2, b2, w3r, b3)

    # Tiny slice (B*4 bytes); garbage rows from the ragged edge block are dropped.
    return out.reshape(num_tiles * tb)[:B].reshape(B, OUT_DIM)


def init_params(key):
    """Mimics PyTorch's default U(-1/sqrt(fan_in), 1/sqrt(fan_in)) init (f32)."""
    ks = jax.random.split(key, 6)

    def uniform(k, shape, fan_in):
        bound = 1.0 / jnp.sqrt(jnp.asarray(fan_in, jnp.float32))
        return jax.random.uniform(k, shape, jnp.float32, -bound, bound)

    w1 = uniform(ks[0], (IN_DIM, HID), IN_DIM)
    b1 = uniform(ks[1], (1, HID), IN_DIM)
    w2 = uniform(ks[2], (HID, HID), HID)
    b2 = uniform(ks[3], (1, HID), HID)
    w3 = uniform(ks[4], (HID, OUT_DIM), HID)
    b3 = uniform(ks[5], (1, OUT_DIM), HID)
    return (w1, b1, w2, b2, w3, b3)


def reference_forward_f32(mem, params):
    """Plain-JAX f32 reference with exact PyTorch semantics."""
    w1, b1, w2, b2, w3, b3 = params
    x = mem.reshape(mem.shape[0], -1).astype(jnp.float32)
    h1 = jnp.maximum(x @ w1 + b1, 0.0)
    h2 = jnp.maximum(h1 @ w2 + b2, 0.0)
    return h2 @ w3 + b3


def reference_forward_bf16(mem, params):
    """Plain-JAX reference mirroring the kernel's bf16-in / f32-accumulate math."""
    w1, b1, w2, b2, w3, b3 = params
    x = mem.reshape(mem.shape[0], -1).astype(jnp.bfloat16)
    h1 = jnp.dot(x, w1.astype(jnp.bfloat16),
                 preferred_element_type=jnp.float32) + b1
    h1 = jnp.maximum(h1, 0.0)
    h2 = jnp.dot(h1.astype(jnp.bfloat16), w2.astype(jnp.bfloat16),
                 preferred_element_type=jnp.float32) + b2
    h2 = jnp.maximum(h2, 0.0)
    return jnp.sum(h2 * w3.reshape(1, HID), axis=-1, keepdims=True) + b3


if __name__ == "__main__":
    key = jax.random.PRNGKey(0)
    k_mem, k_params = jax.random.split(key)

    params = init_params(k_params)
    kernel_params = prepare_params(params)  # one-time bf16 repack

    # 1) Small, tile-aligned batch (f32 x stream).
    mem8 = jax.random.normal(k_mem, (8, HISTORY_DEPTH, 128), dtype=jnp.float32)
    out8 = jax.block_until_ready(critic_forward(mem8, kernel_params))
    assert out8.shape == (8, OUT_DIM), out8.shape
    err_bf16 = float(jnp.max(jnp.abs(out8 - reference_forward_bf16(mem8, params))))
    err_f32 = float(jnp.max(jnp.abs(out8 - reference_forward_f32(mem8, params))))
    assert err_bf16 < 1e-3, f"mismatch vs bf16-matched reference: {err_bf16}"
    assert err_f32 < 5e-2, f"mismatch vs f32 reference: {err_f32}"

    # 2) Ragged batch (B % tb != 0) — exercises the un-padded edge block path.
    mem50 = jax.random.normal(k_mem, (50, HISTORY_DEPTH, 128), dtype=jnp.float32)
    out50 = jax.block_until_ready(critic_forward(mem50, kernel_params))
    assert out50.shape == (50, OUT_DIM), out50.shape
    err50 = float(jnp.max(jnp.abs(out50 - reference_forward_bf16(mem50, params))))
    assert err50 < 1e-3, f"ragged-batch mismatch: {err50}"

    # 3) Producer-emitted bf16 x stream (halves the dominant HBM stream).
    mem24 = jax.random.normal(
        k_mem, (24, HISTORY_DEPTH, 128), dtype=jnp.float32).astype(jnp.bfloat16)
    out24 = jax.block_until_ready(critic_forward(mem24, kernel_params))
    assert out24.shape == (24, OUT_DIM), out24.shape
    err24 = float(jnp.max(jnp.abs(out24 - reference_forward_bf16(mem24, params))))
    assert err24 < 1e-3, f"bf16-stream mismatch: {err24}"

    print("KERNEL_OK")
</pallas_src>

<mosaic_0001>
module attributes {stable_mosaic.version = 11 : i64} {
  func.func @critic_kernel(%arg0: i32, %arg1: memref<8x512xf32, #tpu.memory_space<vmem>>, %arg2: memref<512x256xbf16, #tpu.memory_space<vmem>>, %arg3: memref<1x256xf32, #tpu.memory_space<vmem>>, %arg4: memref<256x256xbf16, #tpu.memory_space<vmem>>, %arg5: memref<1x256xf32, #tpu.memory_space<vmem>>, %arg6: memref<1x256xf32, #tpu.memory_space<vmem>>, %arg7: memref<1xf32, #tpu.memory_space<smem>>, %arg8: memref<1x1x8xf32, #tpu.memory_space<vmem>>) attributes {dimension_semantics = [#tpu.dimension_semantics<parallel>], iteration_bounds = array<i64: 1>, scalar_prefetch = 0 : i64, scratch_operands = 0 : i64, tpu.core_type = #tpu.core_type<tc>, window_params = [{transform_indices = @transform_0, window_bounds = array<i64: 8, 512>}, {pipeline_mode = #tpu.pipeline_mode<synchronous>, transform_indices = @transform_1, window_bounds = array<i64: 512, 256>}, {pipeline_mode = #tpu.pipeline_mode<synchronous>, transform_indices = @transform_2, window_bounds = array<i64: 1, 256>}, {pipeline_mode = #tpu.pipeline_mode<synchronous>, transform_indices = @transform_3, window_bounds = array<i64: 256, 256>}, {pipeline_mode = #tpu.pipeline_mode<synchronous>, transform_indices = @transform_4, window_bounds = array<i64: 1, 256>}, {pipeline_mode = #tpu.pipeline_mode<synchronous>, transform_indices = @transform_5, window_bounds = array<i64: 1, 256>}, {transform_indices = @transform_6, window_bounds = array<i64: 1>}, {transform_indices = @transform_7, window_bounds = array<i64: 1, 1, 8>}]} {
    %c0 = arith.constant 0 : index
    %c0_0 = arith.constant 0 : index
    %0 = vector.load %arg1[%c0, %c0_0] : memref<8x512xf32, #tpu.memory_space<vmem>>, vector<8x512xf32>
    %1 = arith.truncf %0 : vector<8x512xf32> to vector<8x512xbf16>
    %c0_1 = arith.constant 0 : index
    %c0_2 = arith.constant 0 : index
    %2 = vector.load %arg2[%c0_1, %c0_2] : memref<512x256xbf16, #tpu.memory_space<vmem>>, vector<512x256xbf16>
    %cst = arith.constant dense<0.000000e+00> : vector<8x256xf32>
    %3 = tpu.matmul %1, %2, %cst {dimension_numbers = #tpu.dot_dimension_numbers<[1], [0], [0], [1], [0, 0, 1, 1], [], []>} : vector<8x512xbf16>, vector<512x256xbf16>, vector<8x256xf32> -> vector<8x256xf32>
    %c0_3 = arith.constant 0 : index
    %c0_4 = arith.constant 0 : index
    %4 = vector.load %arg3[%c0_3, %c0_4] : memref<1x256xf32, #tpu.memory_space<vmem>>, vector<1x256xf32>
    %5 = vector.broadcast %4 : vector<1x256xf32> to vector<8x256xf32>
    %6 = arith.addf %3, %5 : vector<8x256xf32>
    %cst_5 = arith.constant 0.000000e+00 : f32
    %7 = vector.broadcast %cst_5 : f32 to vector<8x256xf32>
    %8 = arith.maximumf %6, %7 : vector<8x256xf32>
    %9 = arith.truncf %8 : vector<8x256xf32> to vector<8x256xbf16>
    %c0_6 = arith.constant 0 : index
    %c0_7 = arith.constant 0 : index
    %10 = vector.load %arg4[%c0_6, %c0_7] : memref<256x256xbf16, #tpu.memory_space<vmem>>, vector<256x256xbf16>
    %cst_8 = arith.constant dense<0.000000e+00> : vector<8x256xf32>
    %11 = tpu.matmul %9, %10, %cst_8 {dimension_numbers = #tpu.dot_dimension_numbers<[1], [0], [0], [1], [0, 0, 1, 1], [], []>} : vector<8x256xbf16>, vector<256x256xbf16>, vector<8x256xf32> -> vector<8x256xf32>
    %c0_9 = arith.constant 0 : index
    %c0_10 = arith.constant 0 : index
    %12 = vector.load %arg5[%c0_9, %c0_10] : memref<1x256xf32, #tpu.memory_space<vmem>>, vector<1x256xf32>
    %13 = vector.broadcast %12 : vector<1x256xf32> to vector<8x256xf32>
    %14 = arith.addf %11, %13 : vector<8x256xf32>
    %cst_11 = arith.constant 0.000000e+00 : f32
    %15 = vector.broadcast %cst_11 : f32 to vector<8x256xf32>
    %16 = arith.maximumf %14, %15 : vector<8x256xf32>
    %c0_12 = arith.constant 0 : index
    %c0_13 = arith.constant 0 : index
    %17 = vector.load %arg6[%c0_12, %c0_13] : memref<1x256xf32, #tpu.memory_space<vmem>>, vector<1x256xf32>
    %18 = vector.broadcast %17 : vector<1x256xf32> to vector<8x256xf32>
    %19 = arith.mulf %16, %18 : vector<8x256xf32>
    %cst_14 = arith.constant dense<0.000000e+00> : vector<8xf32>
    %20 = vector.multi_reduction <add>, %19, %cst_14 [1] : vector<8x256xf32> to vector<8xf32>
    %c0_15 = arith.constant 0 : index
    %21 = memref.load %arg7[%c0_15] : memref<1xf32, #tpu.memory_space<smem>>
    %22 = vector.broadcast %21 : f32 to vector<8xf32>
    %23 = arith.addf %20, %22 : vector<8xf32>
    %24 = vector.shape_cast %23 : vector<8xf32> to vector<1x1x8xf32>
    %c0_16 = arith.constant 0 : index
    %c0_17 = arith.constant 0 : index
    %c0_18 = arith.constant 0 : index
    %25 = vector.load %arg8[%c0_16, %c0_17, %c0_18] : memref<1x1x8xf32, #tpu.memory_space<vmem>>, vector<1x1x8xf32>
    tpu.vector_store %arg8[%c0_16, %c0_17, %c0_18], %24 {strides = array<i32>} : memref<1x1x8xf32, #tpu.memory_space<vmem>>, vector<1x1x8xf32>,
    return
  }
  func.func @transform_0(%arg0: i32) -> (i32, i32) {
    %c0_i32 = arith.constant 0 : i32
    %c0_i32_0 = arith.constant 0 : i32
    return %arg0, %c0_i32 : i32, i32
  }
  func.func @transform_1(%arg0: i32) -> (i32, i32) {
    %c0_i32 = arith.constant 0 : i32
    %c0_i32_0 = arith.constant 0 : i32
    %c0_i32_1 = arith.constant 0 : i32
    return %c0_i32, %c0_i32_0 : i32, i32
  }
  func.func @transform_2(%arg0: i32) -> (i32, i32) {
    %c0_i32 = arith.constant 0 : i32
    %c0_i32_0 = arith.constant 0 : i32
    %c0_i32_1 = arith.constant 0 : i32
    return %c0_i32, %c0_i32_0 : i32, i32
  }
  func.func @transform_3(%arg0: i32) -> (i32, i32) {
    %c0_i32 = arith.constant 0 : i32
    %c0_i32_0 = arith.constant 0 : i32
    %c0_i32_1 = arith.constant 0 : i32
    return %c0_i32, %c0_i32_0 : i32, i32
  }
  func.func @transform_4(%arg0: i32) -> (i32, i32) {
    %c0_i32 = arith.constant 0 : i32
    %c0_i32_0 = arith.constant 0 : i32
    %c0_i32_1 = arith.constant 0 : i32
    return %c0_i32, %c0_i32_0 : i32, i32
  }
  func.func @transform_5(%arg0: i32) -> (i32, i32) {
    %c0_i32 = arith.constant 0 : i32
    %c0_i32_0 = arith.constant 0 : i32
    %c0_i32_1 = arith.constant 0 : i32
    return %c0_i32, %c0_i32_0 : i32, i32
  }
  func.func @transform_6(%arg0: i32) -> i32 {
    %c0_i32 = arith.constant 0 : i32
    %c0_i32_0 = arith.constant 0 : i32
    return %c0_i32 : i32
  }
  func.func @transform_7(%arg0: i32) -> (i32, i32, i32) {
    %c0_i32 = arith.constant 0 : i32
    %c0_i32_0 = arith.constant 0 : i32
    %c0_i32_1 = arith.constant 0 : i32
    return %arg0, %c0_i32, %c0_i32_0 : i32, i32, i32
  }
}

</mosaic_0001>

<llo_original>
// kernel: tpu_custom_call.1
$region0: #{tpu_custom_call.1}
  #allocation0 [shape = 'u32[]', space=smem, size = 0x4, offset = 0x4, fixed_abs, tag = 'smem constant byte address 0x4 - core index']
  #allocation1 [shape = 'u32[144,128]{1,0:T(1,128)}', space=vmem, size = 0x12000, scoped, tag = 'internal scratch']
  #allocation2 [shape = 'f32[1]{0:T(128)S(6)}', space=smem, size = 0x200, scoped, tag = 'scoped memory for tpu_custom_call.1']
  %s0 = inlined_call_operand.hbm [shape: f32[8,512], index: 0, kind: input, shape index: {}]
  %s1 = inlined_call_operand.hbm [shape: bf16[512,256], index: 1, kind: input, shape index: {}]
  %s2 = inlined_call_operand.vmem [shape: f32[1,256], index: 2, kind: input, shape index: {}]
  %s3 = inlined_call_operand.hbm [shape: bf16[256,256], index: 3, kind: input, shape index: {}]
  %s4 = inlined_call_operand.vmem [shape: f32[1,256], index: 4, kind: input, shape index: {}]
  %s5 = inlined_call_operand.vmem [shape: f32[1,256], index: 5, kind: input, shape index: {}]
  %s6 = inlined_call_operand.<no memory space> [shape: f32[1], index: 6, kind: input, shape index: {}]
  %s7 = inlined_call_operand.hbm [shape: f32[1,1,8], index: 7, kind: output, shape index: {}]
  %s8 = sld [smem:[#allocation0]]
  $region50: #{tpu_custom_call.1} parent=0
    _
  %s10 = ssub.s32 1, %s8
  %s11 = scalar_select 0, %s10, %s8
  %12 = sst [smem:[#allocation2]] %s6
  $region1: #{tpu_custom_call.1} parent=0
    #allocation3 [shape = 'u8[16384]{0}', space=vmem, size = 0x4000, scoped, tag = 'input window, operand 0, single buffered']
    #allocation4 [shape = 's32[1]{0}', space=sflag, size = 0x4, scoped, tag = 'scoped memory for tpu_custom_call.1']
    #allocation5 [shape = 's32[1]{0}', space=sflag, size = 0x4, scoped, tag = 'scoped memory for tpu_custom_call.1']
    #allocation6 [shape = 'u8[262144]{0}', space=vmem, size = 0x40000, scoped, tag = 'input window, operand 1, single buffered']
    #allocation7 [shape = 's32[1]{0}', space=sflag, size = 0x4, scoped, tag = 'scoped memory for tpu_custom_call.1']
    #allocation8 [shape = 'u8[131072]{0}', space=vmem, size = 0x20000, scoped, tag = 'input window, operand 3, single buffered']
    #allocation9 [shape = 'u8[512]{0}', space=vmem, size = 0x400, scoped, tag = 'output window, operand 0, single buffered']
    %13 = vsyncpa [#allocation4], 0
    %14 = vsyncpa [#allocation7], 0
    %15 = vsyncpa [#allocation5], 0
    // Predicated region
    $region2: #{tpu_custom_call.1} parent=1 // pred_check
      _
    $region3: #{tpu_custom_call.1} parent=1 // pred_check_branch
      %17 = sbr.rel (0) target = $region5
    $region4: #{tpu_custom_call.1} parent=1 // pred_region
      %s19 = ssub.s32 512, 512
      %20 = vsyncadd [#allocation4], %s19
      %s22 = sshll.u32 [#allocation3], 4
      %s23 = int_to_ptr.vmem [resolvable:$true] %s22
      %25 = dma.hbm_to_vmem [thread:$0]  %s0, 512, %s23, [#allocation4]
    $region5: #{tpu_custom_call.1} parent=1 // pred_fallthru
      _
    // Predicated region
    $region6: #{tpu_custom_call.1} parent=1 // pred_check
      _
    $region7: #{tpu_custom_call.1} parent=1 // pred_check_branch
      %27 = sbr.rel (0) target = $region9
    $region8: #{tpu_custom_call.1} parent=1 // pred_region
      %s29 = ssub.s32 8192, 8192
      %30 = vsyncadd [#allocation7], %s29
      %s31 = sshll.u32 [#allocation6], 4
      %s32 = int_to_ptr.vmem [resolvable:$true] %s31
      %37 = dma.hbm_to_vmem [thread:$0]  %s1, 8192, %s32, [#allocation7], 128, 128, 8
    $region9: #{tpu_custom_call.1} parent=1 // pred_fallthru
      _
    // Predicated region
    $region10: #{tpu_custom_call.1} parent=1 // pred_check
      _
    $region11: #{tpu_custom_call.1} parent=1 // pred_check_branch
      %39 = sbr.rel (0) target = $region13
    $region12: #{tpu_custom_call.1} parent=1 // pred_region
      _
    $region13: #{tpu_custom_call.1} parent=1 // pred_fallthru
      _
    // Predicated region
    $region14: #{tpu_custom_call.1} parent=1 // pred_check
      _
    $region15: #{tpu_custom_call.1} parent=1 // pred_check_branch
      %41 = sbr.rel (0) target = $region17
    $region16: #{tpu_custom_call.1} parent=1 // pred_region
      %s43 = ssub.s32 4096, 4096
      %44 = vsyncadd [#allocation7], %s43
      %s45 = sshll.u32 [#allocation8], 4
      %s46 = int_to_ptr.vmem [resolvable:$true] %s45
      %51 = dma.hbm_to_vmem [thread:$0]  %s3, 4096, %s46, [#allocation7], 128, 128, 8
    $region17: #{tpu_custom_call.1} parent=1 // pred_fallthru
      _
    // Predicated region
    $region18: #{tpu_custom_call.1} parent=1 // pred_check
      _
    $region19: #{tpu_custom_call.1} parent=1 // pred_check_branch
      %53 = sbr.rel (0) target = $region21
    $region20: #{tpu_custom_call.1} parent=1 // pred_region
      _
    $region21: #{tpu_custom_call.1} parent=1 // pred_fallthru
      _
    // Predicated region
    $region22: #{tpu_custom_call.1} parent=1 // pred_check
      _
    $region23: #{tpu_custom_call.1} parent=1 // pred_check_branch
      %55 = sbr.rel (0) target = $region25
    $region24: #{tpu_custom_call.1} parent=1 // pred_region
      _
    $region25: #{tpu_custom_call.1} parent=1 // pred_fallthru
      _
    // Predicated region
    $region26: #{tpu_custom_call.1} parent=1 // pred_check
      _
    $region27: #{tpu_custom_call.1} parent=1 // pred_check_branch
      %57 = sbr.rel (0) target = $region29
    $region28: #{tpu_custom_call.1} parent=1 // pred_region
      _
    $region29: #{tpu_custom_call.1} parent=1 // pred_fallthru
      _
    // Predicated region
    $region30: #{tpu_custom_call.1} parent=1 // pred_check
      _
    $region31: #{tpu_custom_call.1} parent=1 // pred_check_branch
      %59 = sbr.rel (0) target = $region33
    $region32: #{tpu_custom_call.1} parent=1 // pred_region
      %60 = dma.done [#allocation4], 512
    $region33: #{tpu_custom_call.1} parent=1 // pred_fallthru
      _
    // Predicated region
    $region34: #{tpu_custom_call.1} parent=1 // pred_check
      _
    $region35: #{tpu_custom_call.1} parent=1 // pred_check_branch
      %62 = sbr.rel (0) target = $region37
    $region36: #{tpu_custom_call.1} parent=1 // pred_region
      %63 = dma.done [#allocation7], 8192
    $region37: #{tpu_custom_call.1} parent=1 // pred_fallthru
      _
    // Predicated region
    $region38: #{tpu_custom_call.1} parent=1 // pred_check
      _
    $region39: #{tpu_custom_call.1} parent=1 // pred_check_branch
      %65 = sbr.rel (0) target = $region41
    $region40: #{tpu_custom_call.1} parent=1 // pred_region
      %66 = dma.done [#allocation7], 4096
    $region41: #{tpu_custom_call.1} parent=1 // pred_fallthru
      _
    %v67 = vld [vmem:[#allocation3] sm:$0xff]
    %v68 = vld [vmem:[#allocation3 + $0x8] sm:$0xff]
    %v69 = vld [vmem:[#allocation3 + $0x10] sm:$0xff]
    %v70 = vld [vmem:[#allocation3 + $0x18] sm:$0xff]
    %v71 = vpack.c.bf16 %v67, %v67
    %v72 = vpack.c.bf16 %v68, %v68
    %v73 = vpack.c.bf16 %v69, %v69
    %v74 = vpack.c.bf16 %v70, %v70
    %v75 = vld [vmem:[#allocation6] sm:$0xff]
    %v76 = vld [vmem:[#allocation6 + $0x8] sm:$0xff]
    %v77 = vld [vmem:[#allocation6 + $0x10] sm:$0xff]
    %v78 = vld [vmem:[#allocation6 + $0x18] sm:$0xff]
    %v79 = vld [vmem:[#allocation6 + $0x20] sm:$0xff]
    %v80 = vld [vmem:[#allocation6 + $0x28] sm:$0xff]
    %v81 = vld [vmem:[#allocation6 + $0x30] sm:$0xff]
    %v82 = vld [vmem:[#allocation6 + $0x38] sm:$0xff]
    %v83 = vld [vmem:[#allocation6 + $0x40] sm:$0xff]
    %v84 = vld [vmem:[#allocation6 + $0x48] sm:$0xff]
    %v85 = vld [vmem:[#allocation6 + $0x50] sm:$0xff]
    %v86 = vld [vmem:[#allocation6 + $0x58] sm:$0xff]
    %v87 = vld [vmem:[#allocation6 + $0x60] sm:$0xff]
    %v88 = vld [vmem:[#allocation6 + $0x68] sm:$0xff]
    %v89 = vld [vmem:[#allocation6 + $0x70] sm:$0xff]
    %v90 = vld [vmem:[#allocation6 + $0x78] sm:$0xff]
    %v91 = vld [vmem:[#allocation6 + $0x80] sm:$0xff]
    %v92 = vld [vmem:[#allocation6 + $0x88] sm:$0xff]
    %v93 = vld [vmem:[#allocation6 + $0x90] sm:$0xff]
    %v94 = vld [vmem:[#allocation6 + $0x98] sm:$0xff]
    %v95 = vld [vmem:[#allocation6 + $0xa0] sm:$0xff]
    %v96 = vld [vmem:[#allocation6 + $0xa8] sm:$0xff]
    %v97 = vld [vmem:[#allocation6 + $0xb0] sm:$0xff]
    %v98 = vld [vmem:[#allocation6 + $0xb8] sm:$0xff]
    %v99 = vld [vmem:[#allocation6 + $0xc0] sm:$0xff]
    %v100 = vld [vmem:[#allocation6 + $0xc8] sm:$0xff]
    %v101 = vld [vmem:[#allocation6 + $0xd0] sm:$0xff]
    %v102 = vld [vmem:[#allocation6 + $0xd8] sm:$0xff]
    %v103 = vld [vmem:[#allocation6 + $0xe0] sm:$0xff]
    %v104 = vld [vmem:[#allocation6 + $0xe8] sm:$0xff]
    %v105 = vld [vmem:[#allocation6 + $0xf0] sm:$0xff]
    %v106 = vld [vmem:[#allocation6 + $0xf8] sm:$0xff]
    %v107 = vld [vmem:[#allocation6 + $0x100] sm:$0xff]
    %v108 = vld [vmem:[#allocation6 + $0x108] sm:$0xff]
    %v109 = vld [vmem:[#allocation6 + $0x110] sm:$0xff]
    %v110 = vld [vmem:[#allocation6 + $0x118] sm:$0xff]
    %v111 = vld [vmem:[#allocation6 + $0x120] sm:$0xff]
    %v112 = vld [vmem:[#allocation6 + $0x128] sm:$0xff]
    %v113 = vld [vmem:[#allocation6 + $0x130] sm:$0xff]
    %v114 = vld [vmem:[#allocation6 + $0x138] sm:$0xff]
    %v115 = vld [vmem:[#allocation6 + $0x140] sm:$0xff]
    %v116 = vld [vmem:[#allocation6 + $0x148] sm:$0xff]
    %v117 = vld [vmem:[#allocation6 + $0x150] sm:$0xff]
    %v118 = vld [vmem:[#allocation6 + $0x158] sm:$0xff]
    %v119 = vld [vmem:[#allocation6 + $0x160] sm:$0xff]
    %v120 = vld [vmem:[#allocation6 + $0x168] sm:$0xff]
    %v121 = vld [vmem:[#allocation6 + $0x170] sm:$0xff]
    %v122 = vld [vmem:[#allocation6 + $0x178] sm:$0xff]
    %v123 = vld [vmem:[#allocation6 + $0x180] sm:$0xff]
    %v124 = vld [vmem:[#allocation6 + $0x188] sm:$0xff]
    %v125 = vld [vmem:[#allocation6 + $0x190] sm:$0xff]
    %v126 = vld [vmem:[#allocation6 + $0x198] sm:$0xff]
    %v127 = vld [vmem:[#allocation6 + $0x1a0] sm:$0xff]
    %v128 = vld [vmem:[#allocation6 + $0x1a8] sm:$0xff]
    %v129 = vld [vmem:[#allocation6 + $0x1b0] sm:$0xff]
    %v130 = vld [vmem:[#allocation6 + $0x1b8] sm:$0xff]
    %v131 = vld [vmem:[#allocation6 + $0x1c0] sm:$0xff]
    %v132 = vld [vmem:[#allocation6 + $0x1c8] sm:$0xff]
    %v133 = vld [vmem:[#allocation6 + $0x1d0] sm:$0xff]
    %v134 = vld [vmem:[#allocation6 + $0x1d8] sm:$0xff]
    %v135 = vld [vmem:[#allocation6 + $0x1e0] sm:$0xff]
    %v136 = vld [vmem:[#allocation6 + $0x1e8] sm:$0xff]
    %v137 = vld [vmem:[#allocation6 + $0x1f0] sm:$0xff]
    %v138 = vld [vmem:[#allocation6 + $0x1f8] sm:$0xff]
    %v139 = vld [vmem:[%s2] sm:$0x3]
    %v141 = vlaneseq
    %v142 = vshrl.u32 %v141, 7
    %v143 = vsub.s32 0, %v142
    %v144 = vrot.slane %v139, %v143
    %v145 = vlaneseq
    %v146 = vshrl.u32 %v145, 7
    %v147 = vsub.s32 1, %v146
    %v148 = vrot.slane %v139, %v147
    %v215 = vunpack.c.l.b16 %v75
    %v216 = vunpack.c.h.b16 %v75
    %v217 = vunpack.c.l.b16 %v76
    %v218 = vunpack.c.h.b16 %v76
    %v219 = vunpack.c.l.b16 %v77
    %v220 = vunpack.c.h.b16 %v77
    %v221 = vunpack.c.l.b16 %v78
    %v222 = vunpack.c.h.b16 %v78
    %v223 = vunpack.c.l.b16 %v79
    %v224 = vunpack.c.h.b16 %v79
    %v225 = vunpack.c.l.b16 %v80
    %v226 = vunpack.c.h.b16 %v80
    %v227 = vunpack.c.l.b16 %v81
    %v228 = vunpack.c.h.b16 %v81
    %v229 = vunpack.c.l.b16 %v82
    %v230 = vunpack.c.h.b16 %v82
    %v231 = vunpack.c.l.b16 %v83
    %v232 = vunpack.c.h.b16 %v83
    %v233 = vunpack.c.l.b16 %v84
    %v234 = vunpack.c.h.b16 %v84
    %v235 = vunpack.c.l.b16 %v85
    %v236 = vunpack.c.h.b16 %v85
    %v237 = vunpack.c.l.b16 %v86
    %v238 = vunpack.c.h.b16 %v86
    %v239 = vunpack.c.l.b16 %v87
    %v240 = vunpack.c.h.b16 %v87
    %v241 = vunpack.c.l.b16 %v88
    %v242 = vunpack.c.h.b16 %v88
    %v243 = vunpack.c.l.b16 %v89
    %v244 = vunpack.c.h.b16 %v89
    %v245 = vunpack.c.l.b16 %v90
    %v246 = vunpack.c.h.b16 %v90
    %v247 = vunpack.c.l.b16 %v91
    %v248 = vunpack.c.h.b16 %v91
    %v249 = vunpack.c.l.b16 %v92
    %v250 = vunpack.c.h.b16 %v92
    %v251 = vunpack.c.l.b16 %v93
    %v252 = vunpack.c.h.b16 %v93
    %v253 = vunpack.c.l.b16 %v94
    %v254 = vunpack.c.h.b16 %v94
    %v255 = vunpack.c.l.b16 %v95
    %v256 = vunpack.c.h.b16 %v95
    %v257 = vunpack.c.l.b16 %v96
    %v258 = vunpack.c.h.b16 %v96
    %v259 = vunpack.c.l.b16 %v97
    %v260 = vunpack.c.h.b16 %v97
    %v261 = vunpack.c.l.b16 %v98
    %v262 = vunpack.c.h.b16 %v98
    %v263 = vunpack.c.l.b16 %v99
    %v264 = vunpack.c.h.b16 %v99
    %v265 = vunpack.c.l.b16 %v100
    %v266 = vunpack.c.h.b16 %v100
    %v267 = vunpack.c.l.b16 %v101
    %v268 = vunpack.c.h.b16 %v101
    %v269 = vunpack.c.l.b16 %v102
    %v270 = vunpack.c.h.b16 %v102
    %v271 = vunpack.c.l.b16 %v103
    %v272 = vunpack.c.h.b16 %v103
    %v273 = vunpack.c.l.b16 %v104
    %v274 = vunpack.c.h.b16 %v104
    %v275 = vunpack.c.l.b16 %v105
    %v276 = vunpack.c.h.b16 %v105
    %v277 = vunpack.c.l.b16 %v106
    %v278 = vunpack.c.h.b16 %v106
    %v279 = vunpack.c.l.b16 %v107
    %v280 = vunpack.c.h.b16 %v107
    %v281 = vunpack.c.l.b16 %v108
    %v282 = vunpack.c.h.b16 %v108
    %v283 = vunpack.c.l.b16 %v109
    %v284 = vunpack.c.h.b16 %v109
    %v285 = vunpack.c.l.b16 %v110
    %v286 = vunpack.c.h.b16 %v110
    %v287 = vunpack.c.l.b16 %v111
    %v288 = vunpack.c.h.b16 %v111
    %v289 = vunpack.c.l.b16 %v112
    %v290 = vunpack.c.h.b16 %v112
    %v291 = vunpack.c.l.b16 %v113
    %v292 = vunpack.c.h.b16 %v113
    %v293 = vunpack.c.l.b16 %v114
    %v294 = vunpack.c.h.b16 %v114
    %v295 = vunpack.c.l.b16 %v115
    %v296 = vunpack.c.h.b16 %v115
    %v297 = vunpack.c.l.b16 %v116
    %v298 = vunpack.c.h.b16 %v116
    %v299 = vunpack.c.l.b16 %v117
    %v300 = vunpack.c.h.b16 %v117
    %v301 = vunpack.c.l.b16 %v118
    %v302 = vunpack.c.h.b16 %v118
    %v303 = vunpack.c.l.b16 %v119
    %v304 = vunpack.c.h.b16 %v119
    %v305 = vunpack.c.l.b16 %v120
    %v306 = vunpack.c.h.b16 %v120
    %v307 = vunpack.c.l.b16 %v121
    %v308 = vunpack.c.h.b16 %v121
    %v309 = vunpack.c.l.b16 %v122
    %v310 = vunpack.c.h.b16 %v122
    %v311 = vunpack.c.l.b16 %v123
    %v312 = vunpack.c.h.b16 %v123
    %v313 = vunpack.c.l.b16 %v124
    %v314 = vunpack.c.h.b16 %v124
    %v315 = vunpack.c.l.b16 %v125
    %v316 = vunpack.c.h.b16 %v125
    %v317 = vunpack.c.l.b16 %v126
    %v318 = vunpack.c.h.b16 %v126
    %v319 = vunpack.c.l.b16 %v127
    %v320 = vunpack.c.h.b16 %v127
    %v321 = vunpack.c.l.b16 %v128
    %v322 = vunpack.c.h.b16 %v128
    %v323 = vunpack.c.l.b16 %v129
    %v324 = vunpack.c.h.b16 %v129
    %v325 = vunpack.c.l.b16 %v130
    %v326 = vunpack.c.h.b16 %v130
    %v327 = vunpack.c.l.b16 %v131
    %v328 = vunpack.c.h.b16 %v131
    %v329 = vunpack.c.l.b16 %v132
    %v330 = vunpack.c.h.b16 %v132
    %v331 = vunpack.c.l.b16 %v133
    %v332 = vunpack.c.h.b16 %v133
    %v333 = vunpack.c.l.b16 %v134
    %v334 = vunpack.c.h.b16 %v134
    %v335 = vunpack.c.l.b16 %v135
    %v336 = vunpack.c.h.b16 %v135
    %v337 = vunpack.c.l.b16 %v136
    %v338 = vunpack.c.h.b16 %v136
    %v339 = vunpack.c.l.b16 %v137
    %v340 = vunpack.c.h.b16 %v137
    %v341 = vunpack.c.l.b16 %v138
    %v342 = vunpack.c.h.b16 %v138
    %v343 = vpack.c.b16 %v217, %v215
    %v344 = vpack.c.b16 %v218, %v216
    %v345 = vpack.c.b16 %v221, %v219
    %v346 = vpack.c.b16 %v222, %v220
    %v347 = vpack.c.b16 %v225, %v223
    %v348 = vpack.c.b16 %v226, %v224
    %v349 = vpack.c.b16 %v229, %v227
    %v350 = vpack.c.b16 %v230, %v228
    %v351 = vpack.c.b16 %v233, %v231
    %v352 = vpack.c.b16 %v234, %v232
    %v353 = vpack.c.b16 %v237, %v235
    %v354 = vpack.c.b16 %v238, %v236
    %v355 = vpack.c.b16 %v241, %v239
    %v356 = vpack.c.b16 %v242, %v240
    %v357 = vpack.c.b16 %v245, %v243
    %v358 = vpack.c.b16 %v246, %v244
    %v359 = vpack.c.b16 %v249, %v247
    %v360 = vpack.c.b16 %v250, %v248
    %v361 = vpack.c.b16 %v253, %v251
    %v362 = vpack.c.b16 %v254, %v252
    %v363 = vpack.c.b16 %v257, %v255
    %v364 = vpack.c.b16 %v258, %v256
    %v365 = vpack.c.b16 %v261, %v259
    %v366 = vpack.c.b16 %v262, %v260
    %v367 = vpack.c.b16 %v265, %v263
    %v368 = vpack.c.b16 %v266, %v264
    %v369 = vpack.c.b16 %v269, %v267
    %v370 = vpack.c.b16 %v270, %v268
    %v371 = vpack.c.b16 %v273, %v271
    %v372 = vpack.c.b16 %v274, %v272
    %v373 = vpack.c.b16 %v277, %v275
    %v374 = vpack.c.b16 %v278, %v276
    %v375 = vpack.c.b16 %v281, %v279
    %v376 = vpack.c.b16 %v282, %v280
    %v377 = vpack.c.b16 %v285, %v283
    %v378 = vpack.c.b16 %v286, %v284
    %v379 = vpack.c.b16 %v289, %v287
    %v380 = vpack.c.b16 %v290, %v288
    %v381 = vpack.c.b16 %v293, %v291
    %v382 = vpack.c.b16 %v294, %v292
    %v383 = vpack.c.b16 %v297, %v295
    %v384 = vpack.c.b16 %v298, %v296
    %v385 = vpack.c.b16 %v301, %v299
    %v386 = vpack.c.b16 %v302, %v300
    %v387 = vpack.c.b16 %v305, %v303
    %v388 = vpack.c.b16 %v306, %v304
    %v389 = vpack.c.b16 %v309, %v307
    %v390 = vpack.c.b16 %v310, %v308
    %v391 = vpack.c.b16 %v313, %v311
    %v392 = vpack.c.b16 %v314, %v312
    %v393 = vpack.c.b16 %v317, %v315
    %v394 = vpack.c.b16 %v318, %v316
    %v395 = vpack.c.b16 %v321, %v319
    %v396 = vpack.c.b16 %v322, %v320
    %v397 = vpack.c.b16 %v325, %v323
    %v398 = vpack.c.b16 %v326, %v324
    %v399 = vpack.c.b16 %v329, %v327
    %v400 = vpack.c.b16 %v330, %v328
    %v401 = vpack.c.b16 %v333, %v331
    %v402 = vpack.c.b16 %v334, %v332
    %v403 = vpack.c.b16 %v337, %v335
    %v404 = vpack.c.b16 %v338, %v336
    %v405 = vpack.c.b16 %v341, %v339
    %v406 = vpack.c.b16 %v342, %v340
    %471 = vmatprep.subr.bf16.mxu0 %v344
    %472 = vmatpush1.bf16.msra.mxu0 %v343
    %473 = vmatprep.subr.bf16.mxu0 %v346
    %474 = vmatpush1.bf16.msra.mxu0 %v345
    %475 = vmatprep.subr.bf16.mxu0 %v348
    %476 = vmatpush1.bf16.msra.mxu0 %v347
    %477 = vmatprep.subr.bf16.mxu0 %v350
    %478 = vmatpush1.bf16.msra.mxu0 %v349
    %479 = vmatprep.subr.bf16.mxu0 %v352
    %480 = vmatpush1.bf16.msra.mxu0 %v351
    %481 = vmatprep.subr.bf16.mxu0 %v354
    %482 = vmatpush1.bf16.msra.mxu0 %v353
    %483 = vmatprep.subr.bf16.mxu0 %v356
    %484 = vmatpush1.bf16.msra.mxu0 %v355
    %485 = vmatprep.subr.bf16.mxu0 %v358
    %486 = vmatpush1.bf16.msra.mxu0 %v357
    %487 = vmatprep.subr.bf16.mxu0 %v360
    %488 = vmatpush1.bf16.msra.mxu0 %v359
    %489 = vmatprep.subr.bf16.mxu0 %v362
    %490 = vmatpush1.bf16.msra.mxu0 %v361
    %491 = vmatprep.subr.bf16.mxu0 %v364
    %492 = vmatpush1.bf16.msra.mxu0 %v363
    %493 = vmatprep.subr.bf16.mxu0 %v366
    %494 = vmatpush1.bf16.msra.mxu0 %v365
    %495 = vmatprep.subr.bf16.mxu0 %v368
    %496 = vmatpush1.bf16.msra.mxu0 %v367
    %497 = vmatprep.subr.bf16.mxu0 %v370
    %498 = vmatpush1.bf16.msra.mxu0 %v369
    %499 = vmatprep.subr.bf16.mxu0 %v372
    %500 = vmatpush1.bf16.msra.mxu0 %v371
    %501 = vmatprep.subr.bf16.mxu0 %v374
    %502 = vmatpush1.bf16.msra.mxu0 %v373
    %503 = vmatprep.mubr.bf16.mxu0 %v72
    %504 = vmatmul.mubr.bf16.gmra.mrb[0].mxu0 %v71
    %v505 = vpop.f32.mrb[0].mxu0
    %v506 = vadd.f32 %v144, %v505
    %v507 = vpop.f32.mrb[0].mxu0
    %v508 = vadd.f32 %v148, %v507
    %v509 = vpop.f32.mrb[0].mxu0
    %v510 = vpop.f32.mrb[0].mxu0
    %511 = vdwg.mxu0
    %512 = vmatprep.subr.bf16.mxu0 %v376
    %513 = vmatpush1.bf16.msra.mxu0 %v375
    %514 = vmatprep.subr.bf16.mxu0 %v378
    %515 = vmatpush1.bf16.msra.mxu0 %v377
    %516 = vmatprep.subr.bf16.mxu0 %v380
    %517 = vmatpush1.bf16.msra.mxu0 %v379
    %518 = vmatprep.subr.bf16.mxu0 %v382
    %519 = vmatpush1.bf16.msra.mxu0 %v381
    %520 = vmatprep.subr.bf16.mxu0 %v384
    %521 = vmatpush1.bf16.msra.mxu0 %v383
    %522 = vmatprep.subr.bf16.mxu0 %v386
    %523 = vmatpush1.bf16.msra.mxu0 %v385
    %524 = vmatprep.subr.bf16.mxu0 %v388
    %525 = vmatpush1.bf16.msra.mxu0 %v387
    %526 = vmatprep.subr.bf16.mxu0 %v390
    %527 = vmatpush1.bf16.msra.mxu0 %v389
    %528 = vmatprep.subr.bf16.mxu0 %v392
    %529 = vmatpush1.bf16.msra.mxu0 %v391
    %530 = vmatprep.subr.bf16.mxu0 %v394
    %531 = vmatpush1.bf16.msra.mxu0 %v393
    %532 = vmatprep.subr.bf16.mxu0 %v396
    %533 = vmatpush1.bf16.msra.mxu0 %v395
    %534 = vmatprep.subr.bf16.mxu0 %v398
    %535 = vmatpush1.bf16.msra.mxu0 %v397
    %536 = vmatprep.subr.bf16.mxu0 %v400
    %537 = vmatpush1.bf16.msra.mxu0 %v399
    %538 = vmatprep.subr.bf16.mxu0 %v402
    %539 = vmatpush1.bf16.msra.mxu0 %v401
    %540 = vmatprep.subr.bf16.mxu0 %v404
    %541 = vmatpush1.bf16.msra.mxu0 %v403
    %542 = vmatprep.subr.bf16.mxu0 %v406
    %543 = vmatpush1.bf16.msra.mxu0 %v405
    %544 = vmatprep.mubr.bf16.mxu0 %v74
    %545 = vmatmul.mubr.bf16.gmra.mrb[0].mxu0 %v73
    %v546 = vpop.f32.mrb[0].mxu0
    %v547 = vadd.f32 %v506, %v546
    %v548 = vpop.f32.mrb[0].mxu0
    %v549 = vadd.f32 %v508, %v548
    %v550 = vpop.f32.mrb[0].mxu0
    %v551 = vpop.f32.mrb[0].mxu0
    %552 = vdwg.mxu0
    %v553 = vmax.f32 %v547, 0.0
    %v554 = vmax.f32 %v549, 0.0
    %v555 = vpack.c.bf16 %v553, %v553
    %v556 = vpack.c.bf16 %v554, %v554
    %v557 = vld [vmem:[#allocation8] sm:$0xff]
    %v558 = vld [vmem:[#allocation8 + $0x8] sm:$0xff]
    %v559 = vld [vmem:[#allocation8 + $0x10] sm:$0xff]
    %v560 = vld [vmem:[#allocation8 + $0x18] sm:$0xff]
    %v561 = vld [vmem:[#allocation8 + $0x20] sm:$0xff]
    %v562 = vld [vmem:[#allocation8 + $0x28] sm:$0xff]
    %v563 = vld [vmem:[#allocation8 + $0x30] sm:$0xff]
    %v564 = vld [vmem:[#allocation8 + $0x38] sm:$0xff]
    %v565 = vld [vmem:[#allocation8 + $0x40] sm:$0xff]
    %v566 = vld [vmem:[#allocation8 + $0x48] sm:$0xff]
    %v567 = vld [vmem:[#allocation8 + $0x50] sm:$0xff]
    %v568 = vld [vmem:[#allocation8 + $0x58] sm:$0xff]
    %v569 = vld [vmem:[#allocation8 + $0x60] sm:$0xff]
    %v570 = vld [vmem:[#allocation8 + $0x68] sm:$0xff]
    %v571 = vld [vmem:[#allocation8 + $0x70] sm:$0xff]
    %v572 = vld [vmem:[#allocation8 + $0x78] sm:$0xff]
    %v573 = vld [vmem:[#allocation8 + $0x80] sm:$0xff]
    %v574 = vld [vmem:[#allocation8 + $0x88] sm:$0xff]
    %v575 = vld [vmem:[#allocation8 + $0x90] sm:$0xff]
    %v576 = vld [vmem:[#allocation8 + $0x98] sm:$0xff]
    %v577 = vld [vmem:[#allocation8 + $0xa0] sm:$0xff]
    %v578 = vld [vmem:[#allocation8 + $0xa8] sm:$0xff]
    %v579 = vld [vmem:[#allocation8 + $0xb0] sm:$0xff]
    %v580 = vld [vmem:[#allocation8 + $0xb8] sm:$0xff]
    %v581 = vld [vmem:[#allocation8 + $0xc0] sm:$0xff]
    %v582 = vld [vmem:[#allocation8 + $0xc8] sm:$0xff]
    %v583 = vld [vmem:[#allocation8 + $0xd0] sm:$0xff]
    %v584 = vld [vmem:[#allocation8 + $0xd8] sm:$0xff]
    %v585 = vld [vmem:[#allocation8 + $0xe0] sm:$0xff]
    %v586 = vld [vmem:[#allocation8 + $0xe8] sm:$0xff]
    %v587 = vld [vmem:[#allocation8 + $0xf0] sm:$0xff]
    %v588 = vld [vmem:[#allocation8 + $0xf8] sm:$0xff]
    %v589 = vld [vmem:[%s4] sm:$0x3]
    %v591 = vlaneseq
    %v592 = vshrl.u32 %v591, 7
    %v593 = vsub.s32 0, %v592
    %v594 = vrot.slane %v589, %v593
    %v595 = vlaneseq
    %v596 = vshrl.u32 %v595, 7
    %v597 = vsub.s32 1, %v596
    %v598 = vrot.slane %v589, %v597
    %v633 = vunpack.c.l.b16 %v557
    %v634 = vunpack.c.h.b16 %v557
    %v635 = vunpack.c.l.b16 %v558
    %v636 = vunpack.c.h.b16 %v558
    %v637 = vunpack.c.l.b16 %v559
    %v638 = vunpack.c.h.b16 %v559
    %v639 = vunpack.c.l.b16 %v560
    %v640 = vunpack.c.h.b16 %v560
    %v641 = vunpack.c.l.b16 %v561
    %v642 = vunpack.c.h.b16 %v561
    %v643 = vunpack.c.l.b16 %v562
    %v644 = vunpack.c.h.b16 %v562
    %v645 = vunpack.c.l.b16 %v563
    %v646 = vunpack.c.h.b16 %v563
    %v647 = vunpack.c.l.b16 %v564
    %v648 = vunpack.c.h.b16 %v564
    %v649 = vunpack.c.l.b16 %v565
    %v650 = vunpack.c.h.b16 %v565
    %v651 = vunpack.c.l.b16 %v566
    %v652 = vunpack.c.h.b16 %v566
    %v653 = vunpack.c.l.b16 %v567
    %v654 = vunpack.c.h.b16 %v567
    %v655 = vunpack.c.l.b16 %v568
    %v656 = vunpack.c.h.b16 %v568
    %v657 = vunpack.c.l.b16 %v569
    %v658 = vunpack.c.h.b16 %v569
    %v659 = vunpack.c.l.b16 %v570
    %v660 = vunpack.c.h.b16 %v570
    %v661 = vunpack.c.l.b16 %v571
    %v662 = vunpack.c.h.b16 %v571
    %v663 = vunpack.c.l.b16 %v572
    %v664 = vunpack.c.h.b16 %v572
    %v665 = vunpack.c.l.b16 %v573
    %v666 = vunpack.c.h.b16 %v573
    %v667 = vunpack.c.l.b16 %v574
    %v668 = vunpack.c.h.b16 %v574
    %v669 = vunpack.c.l.b16 %v575
    %v670 = vunpack.c.h.b16 %v575
    %v671 = vunpack.c.l.b16 %v576
    %v672 = vunpack.c.h.b16 %v576
    %v673 = vunpack.c.l.b16 %v577
    %v674 = vunpack.c.h.b16 %v577
    %v675 = vunpack.c.l.b16 %v578
    %v676 = vunpack.c.h.b16 %v578
    %v677 = vunpack.c.l.b16 %v579
    %v678 = vunpack.c.h.b16 %v579
    %v679 = vunpack.c.l.b16 %v580
    %v680 = vunpack.c.h.b16 %v580
    %v681 = vunpack.c.l.b16 %v581
    %v682 = vunpack.c.h.b16 %v581
    %v683 = vunpack.c.l.b16 %v582
    %v684 = vunpack.c.h.b16 %v582
    %v685 = vunpack.c.l.b16 %v583
    %v686 = vunpack.c.h.b16 %v583
    %v687 = vunpack.c.l.b16 %v584
    %v688 = vunpack.c.h.b16 %v584
    %v689 = vunpack.c.l.b16 %v585
    %v690 = vunpack.c.h.b16 %v585
    %v691 = vunpack.c.l.b16 %v586
    %v692 = vunpack.c.h.b16 %v586
    %v693 = vunpack.c.l.b16 %v587
    %v694 = vunpack.c.h.b16 %v587
    %v695 = vunpack.c.l.b16 %v588
    %v696 = vunpack.c.h.b16 %v588
    %v697 = vpack.c.b16 %v635, %v633
    %v698 = vpack.c.b16 %v636, %v634
    %v699 = vpack.c.b16 %v639, %v637
    %v700 = vpack.c.b16 %v640, %v638
    %v701 = vpack.c.b16 %v643, %v641
    %v702 = vpack.c.b16 %v644, %v642
    %v703 = vpack.c.b16 %v647, %v645
    %v704 = vpack.c.b16 %v648, %v646
    %v705 = vpack.c.b16 %v651, %v649
    %v706 = vpack.c.b16 %v652, %v650
    %v707 = vpack.c.b16 %v655, %v653
    %v708 = vpack.c.b16 %v656, %v654
    %v709 = vpack.c.b16 %v659, %v657
    %v710 = vpack.c.b16 %v660, %v658
    %v711 = vpack.c.b16 %v663, %v661
    %v712 = vpack.c.b16 %v664, %v662
    %v713 = vpack.c.b16 %v667, %v665
    %v714 = vpack.c.b16 %v668, %v666
    %v715 = vpack.c.b16 %v671, %v669
    %v716 = vpack.c.b16 %v672, %v670
    %v717 = vpack.c.b16 %v675, %v673
    %v718 = vpack.c.b16 %v676, %v674
    %v719 = vpack.c.b16 %v679, %v677
    %v720 = vpack.c.b16 %v680, %v678
    %v721 = vpack.c.b16 %v683, %v681
    %v722 = vpack.c.b16 %v684, %v682
    %v723 = vpack.c.b16 %v687, %v685
    %v724 = vpack.c.b16 %v688, %v686
    %v725 = vpack.c.b16 %v691, %v689
    %v726 = vpack.c.b16 %v692, %v690
    %v727 = vpack.c.b16 %v695, %v693
    %v728 = vpack.c.b16 %v696, %v694
    %761 = vmatprep.subr.bf16.mxu0 %v698
    %762 = vmatpush1.bf16.msra.mxu0 %v697
    %763 = vmatprep.subr.bf16.mxu0 %v700
    %764 = vmatpush1.bf16.msra.mxu0 %v699
    %765 = vmatprep.subr.bf16.mxu0 %v702
    %766 = vmatpush1.bf16.msra.mxu0 %v701
    %767 = vmatprep.subr.bf16.mxu0 %v704
    %768 = vmatpush1.bf16.msra.mxu0 %v703
    %769 = vmatprep.subr.bf16.mxu0 %v706
    %770 = vmatpush1.bf16.msra.mxu0 %v705
    %771 = vmatprep.subr.bf16.mxu0 %v708
    %772 = vmatpush1.bf16.msra.mxu0 %v707
    %773 = vmatprep.subr.bf16.mxu0 %v710
    %774 = vmatpush1.bf16.msra.mxu0 %v709
    %775 = vmatprep.subr.bf16.mxu0 %v712
    %776 = vmatpush1.bf16.msra.mxu0 %v711
    %777 = vmatprep.subr.bf16.mxu0 %v714
    %778 = vmatpush1.bf16.msra.mxu0 %v713
    %779 = vmatprep.subr.bf16.mxu0 %v716
    %780 = vmatpush1.bf16.msra.mxu0 %v715
    %781 = vmatprep.subr.bf16.mxu0 %v718
    %782 = vmatpush1.bf16.msra.mxu0 %v717
    %783 = vmatprep.subr.bf16.mxu0 %v720
    %784 = vmatpush1.bf16.msra.mxu0 %v719
    %785 = vmatprep.subr.bf16.mxu0 %v722
    %786 = vmatpush1.bf16.msra.mxu0 %v721
    %787 = vmatprep.subr.bf16.mxu0 %v724
    %788 = vmatpush1.bf16.msra.mxu0 %v723
    %789 = vmatprep.subr.bf16.mxu0 %v726
    %790 = vmatpush1.bf16.msra.mxu0 %v725
    %791 = vmatprep.subr.bf16.mxu0 %v728
    %792 = vmatpush1.bf16.msra.mxu0 %v727
    %793 = vmatprep.mubr.bf16.mxu0 %v556
    %794 = vmatmul.mubr.bf16.gmra.mrb[0].mxu0 %v555
    %v795 = vpop.f32.mrb[0].mxu0
    %v796 = vadd.f32 %v594, %v795
    %v797 = vpop.f32.mrb[0].mxu0
    %v798 = vadd.f32 %v598, %v797
    %v799 = vpop.f32.mrb[0].mxu0
    %v800 = vpop.f32.mrb[0].mxu0
    %801 = vdwg.mxu0
    %v802 = vmax.f32 %v796, 0.0
    %v803 = vmax.f32 %v798, 0.0
    %v804 = vld [vmem:[%s5] sm:$0x3]
    %v806 = vlaneseq
    %v807 = vshrl.u32 %v806, 7
    %v808 = vsub.s32 0, %v807
    %v809 = vrot.slane %v804, %v808
    %v810 = vlaneseq
    %v811 = vshrl.u32 %v810, 7
    %v812 = vsub.s32 1, %v811
    %v813 = vrot.slane %v804, %v812
    %v816 = vmul.f32 %v802, %v809
    %v817 = vmul.f32 %v803, %v813
    %v818 = vadd.f32 %v816, %v817
    %819 = vadd.xlane.f32.xlu0 %v818
    %v820 = vpop.xlane.xlu0 %819
    %s821 = sld [smem:[#allocation2]]
    %v822 = vstv %s821
    %v823 = vadd.f32 %v820, %v822
    %v825 = vlaneseq
    %v826 = vand.u32 %v825, 127
    %v827 = vlaneseq
    %v828 = vshrl.u32 %v827, 7
    %v829 = vsub.s32 %v826, %v828
    %v830 = vrot.slane %v823, %v829
    %vm832 = vcmask 57344
    %833 = vst.msk [vmem:[#allocation9] sm:$0x1] %vm832, %v830
    // Predicated region
    $region42: #{tpu_custom_call.1} parent=1 // pred_check
      _
    $region43: #{tpu_custom_call.1} parent=1 // pred_check_branch
      %835 = sbr.rel (0) target = $region45
    $region44: #{tpu_custom_call.1} parent=1 // pred_region
      %s837 = ssub.s32 16, 16
      %838 = vsyncadd [#allocation5], %s837
      %s840 = sshll.u32 [#allocation9], 4
      %s841 = int_to_ptr.vmem [resolvable:$true] %s840
      %843 = dma.vmem_to_hbm [thread:$0]  %s841, 16, %s7, [#allocation5]
    $region45: #{tpu_custom_call.1} parent=1 // pred_fallthru
      _
    // Predicated region
    $region46: #{tpu_custom_call.1} parent=1 // pred_check
      _
    $region47: #{tpu_custom_call.1} parent=1 // pred_check_branch
      %845 = sbr.rel (0) target = $region49
    $region48: #{tpu_custom_call.1} parent=1 // pred_region
      %846 = dma.done [#allocation5], 16
    $region49: #{tpu_custom_call.1} parent=1 // pred_fallthru
      _
    %847 = vsyncpa [#allocation4], 1
    %848 = vsyncpa [#allocation7], 1
    %849 = vsyncpa [#allocation5], 1

</llo_original>
